<compile_context>
chip_gen: v7x
topology: tpu7x:2x2x1
jax: 0.10.0
libtpu: 0.0.40
codegen_flags: <defaults>
</compile_context>

<pallas_src>
import functools

import jax
import jax.numpy as jnp
from jax.experimental import pallas as pl
from jax.experimental.pallas import tpu as pltpu


def _cosface_kernel(cos_ref, lab_ref, out_ref, *, s, m, block_c):
    # cos_ref: (TB, TC) tile of cosine, lab_ref: (TB, 1) int32 labels.
    cos = cos_ref[...].astype(jnp.float32)
    tb, tc = cos.shape
    # Shift the label by this tile's first global column; then a plain local
    # iota comparison suffices ((TB,1) subtract instead of a (TB,TC) add).
    lab = lab_ref[...] - pl.program_id(1) * block_c            # (TB, 1)
    col = jax.lax.broadcasted_iota(jnp.int32, (tb, tc), 1)     # local col ids
    # label == -1 (or any negative sentinel) can never match: col >= 0 while
    # the shifted label stays negative.  Out-of-range positive labels simply
    # get no margin, same as the PyTorch scatter_ semantics.
    hit = col == lab
    m_hot = jnp.where(hit, jnp.float32(m), jnp.float32(0.0))
    out_ref[...] = ((cos - m_hot) * jnp.float32(s)).astype(out_ref.dtype)


def _round_up(x, mult):
    return ((x + mult - 1) // mult) * mult


def cosface_forward(cosine, label, *, s=64.0, m=0.4, donate_cosine=False):
    """cosine: [B, C] float32/bfloat16, label: [B] int (any int dtype)."""
    B, C = cosine.shape
    label2d = label.astype(jnp.int32).reshape(B, 1)
    itemsize = jnp.dtype(cosine.dtype).itemsize

    # ---- generation-aware VMEM budget ------------------------------------
    try:
        vmem_cap = pltpu.get_tpu_info().vmem_capacity_bytes
    except Exception:  # pragma: no cover - conservative fallback (v7x per-TC)
        vmem_cap = 64 * 1024 * 1024
    big_vmem = vmem_cap >= 96 * 1024 * 1024     # v5e/v6e: 128 MiB; v7x: 64 MiB
    max_block_rows = 512
    max_block_cols = 4096 if big_vmem else 2048  # 8 MiB vs 4 MiB f32 blocks
    vmem_limit = (64 if big_vmem else 32) * 1024 * 1024

    # ---- block sizing ------------------------------------------------------
    # Full dim if small (always legal); otherwise a large (8,128)-aligned block.
    block_b = B if B <= max_block_rows else max_block_rows   # mult of 8 if tiled
    block_c = C if C <= max_block_cols else max_block_cols   # mult of 128 if tiled

    # v7x has 2 TensorCores; "parallel" only helps with >= 2 grid blocks.  If a
    # non-trivial input would collapse to a single block, split one axis.  This
    # is harmless on single-TC chips (each half is still a multi-MiB block).
    total_bytes = B * C * itemsize
    if (pl.cdiv(B, block_b) * pl.cdiv(C, block_c)) == 1 and total_bytes >= (2 << 20):
        if B >= 16:
            block_b = min(block_b, max(8, _round_up(pl.cdiv(B, 2), 8)))
        elif C >= 256:
            block_c = min(block_c, max(128, _round_up(pl.cdiv(C, 2), 128)))

    grid = (pl.cdiv(B, block_b), pl.cdiv(C, block_c))

    kernel = functools.partial(_cosface_kernel, s=s, m=m, block_c=block_c)

    cost = pl.CostEstimate(
        flops=3 * B * C,                           # sub, mul, select
        transcendentals=0,
        bytes_accessed=2 * B * C * itemsize + 4 * B,
    )

    return pl.pallas_call(
        kernel,
        out_shape=jax.ShapeDtypeStruct((B, C), cosine.dtype),
        grid_spec=pl.GridSpec(
            grid=grid,
            in_specs=[
                pl.BlockSpec((block_b, block_c), lambda i, j: (i, j)),
                # Label block index is constant along the inner C axis, so its
                # DMA is skipped between C tiles.
                pl.BlockSpec((block_b, 1), lambda i, j: (i, 0)),
            ],
            out_specs=pl.BlockSpec((block_b, block_c), lambda i, j: (i, j)),
        ),
        compiler_params=pltpu.CompilerParams(
            # Independent axes -> shardable across v7x's 2 TensorCores.
            dimension_semantics=("parallel", "parallel"),
            vmem_limit_bytes=vmem_limit,
        ),
        cost_estimate=cost,
        # Donate `cosine` when the caller no longer needs it (matches the
        # in-place mutation semantics of the PyTorch module).
        input_output_aliases={0: 0} if donate_cosine else {},
    )(cosine, label2d)


def cosface_ref(cosine, label, *, s=64.0, m=0.4):
    """Pure-JAX reference matching the PyTorch module (computed in f32)."""
    cos32 = cosine.astype(jnp.float32)
    B, C = cos32.shape
    col = jnp.arange(C)[None, :]
    hit = (label[:, None] != -1) & (col == label[:, None])
    out = (cos32 - m * hit.astype(jnp.float32)) * s
    return out.astype(cosine.dtype)


if __name__ == "__main__":
    key = jax.random.PRNGKey(0)
    k1, k2, k3, k4, k5, k6 = jax.random.split(key, 6)

    # Case 1: tiny tile-friendly shape (single block, grid = (1, 1)).
    B, C = 8, 128
    cosine = jax.random.uniform(k1, (B, C), jnp.float32, minval=-1.0, maxval=1.0)
    label = jax.random.randint(k2, (B,), -1, C, dtype=jnp.int32)
    ref = cosface_ref(cosine, label, s=64.0, m=0.4)
    out = jax.block_until_ready(cosface_forward(cosine, label, s=64.0, m=0.4))
    assert jnp.allclose(out, ref, atol=1e-5), "mismatch vs reference (case 1)"

    # Case 2: non-power-of-two shape, donated input (compute ref first).
    B2, C2 = 24, 384
    cosine2 = jax.random.uniform(k3, (B2, C2), jnp.float32, minval=-1.0, maxval=1.0)
    label2 = jax.random.randint(k4, (B2,), -1, C2, dtype=jnp.int32)
    ref2 = cosface_ref(cosine2, label2, s=64.0, m=0.4)
    out2 = jax.block_until_ready(
        cosface_forward(cosine2, label2, s=64.0, m=0.4, donate_cosine=True))
    assert jnp.allclose(out2, ref2, atol=1e-5), "mismatch vs reference (case 2)"

    # Case 3: bfloat16 I/O (halves HBM traffic; compute stays f32 in-kernel).
    B3, C3 = 16, 256
    cosine3 = jax.random.uniform(
        k5, (B3, C3), jnp.float32, minval=-1.0, maxval=1.0).astype(jnp.bfloat16)
    label3 = jax.random.randint(k6, (B3,), -1, C3, dtype=jnp.int32)
    ref3 = cosface_ref(cosine3, label3, s=64.0, m=0.4)
    out3 = jax.block_until_ready(cosface_forward(cosine3, label3, s=64.0, m=0.4))
    assert jnp.allclose(out3.astype(jnp.float32), ref3.astype(jnp.float32),
                        rtol=1e-2, atol=1e-2), "mismatch vs reference (case 3)"

    print("KERNEL_OK")
</pallas_src>

<mosaic_0001>
module attributes {stable_mosaic.version = 11 : i64} {
  func.func @_cosface_kernel(%arg0: i32, %arg1: i32, %arg2: memref<8x128xf32, #tpu.memory_space<vmem>>, %arg3: memref<8x1xi32, #tpu.memory_space<vmem>>, %arg4: memref<8x128xf32, #tpu.memory_space<vmem>>) attributes {dimension_semantics = [#tpu.dimension_semantics<parallel>, #tpu.dimension_semantics<parallel>], iteration_bounds = array<i64: 1, 1>, scalar_prefetch = 0 : i64, scratch_operands = 0 : i64, tpu.core_type = #tpu.core_type<tc>, window_params = [{transform_indices = @transform_0, window_bounds = array<i64: 8, 128>}, {transform_indices = @transform_1, window_bounds = array<i64: 8, 1>}, {transform_indices = @transform_2, window_bounds = array<i64: 8, 128>}]} {
    %c0 = arith.constant 0 : index
    %c0_0 = arith.constant 0 : index
    %0 = vector.load %arg2[%c0, %c0_0] : memref<8x128xf32, #tpu.memory_space<vmem>>, vector<8x128xf32>
    %c0_1 = arith.constant 0 : index
    %c0_2 = arith.constant 0 : index
    %1 = vector.load %arg3[%c0_1, %c0_2] : memref<8x1xi32, #tpu.memory_space<vmem>>, vector<8x1xi32>
    %c128_i32 = arith.constant 128 : i32
    %2 = arith.muli %arg1, %c128_i32 : i32
    %3 = vector.broadcast %2 : i32 to vector<8x1xi32>
    %4 = arith.subi %1, %3 : vector<8x1xi32>
    %5 = tpu.iota {dimensions = array<i32: 1>} : vector<8x128xi32>
    %6 = vector.broadcast %4 : vector<8x1xi32> to vector<8x128xi32>
    %7 = arith.cmpi eq, %5, %6 : vector<8x128xi32>
    %cst = arith.constant 4.000000e-01 : f32
    %cst_3 = arith.constant 0.000000e+00 : f32
    %8 = vector.broadcast %cst : f32 to vector<8x128xf32>
    %9 = vector.broadcast %cst_3 : f32 to vector<8x128xf32>
    %10 = arith.select %7, %8, %9 : vector<8x128xi1>, vector<8x128xf32>
    %11 = arith.subf %0, %10 : vector<8x128xf32>
    %cst_4 = arith.constant 6.400000e+01 : f32
    %12 = vector.broadcast %cst_4 : f32 to vector<8x128xf32>
    %13 = arith.mulf %11, %12 : vector<8x128xf32>
    %c0_5 = arith.constant 0 : index
    %c0_6 = arith.constant 0 : index
    %14 = vector.load %arg4[%c0_5, %c0_6] : memref<8x128xf32, #tpu.memory_space<vmem>>, vector<8x128xf32>
    tpu.vector_store %arg4[%c0_5, %c0_6], %13 {strides = array<i32>} : memref<8x128xf32, #tpu.memory_space<vmem>>, vector<8x128xf32>,
    return
  }
  func.func @transform_0(%arg0: i32, %arg1: i32) -> (i32, i32) {
    %c0_i32 = arith.constant 0 : i32
    return %arg0, %arg1 : i32, i32
  }
  func.func @transform_1(%arg0: i32, %arg1: i32) -> (i32, i32) {
    %c0_i32 = arith.constant 0 : i32
    %c0_i32_0 = arith.constant 0 : i32
    return %arg0, %c0_i32 : i32, i32
  }
  func.func @transform_2(%arg0: i32, %arg1: i32) -> (i32, i32) {
    %c0_i32 = arith.constant 0 : i32
    return %arg0, %arg1 : i32, i32
  }
}

</mosaic_0001>

<llo_original>
// kernel: tpu_custom_call.1
$region0: #{tpu_custom_call.1}
  #allocation0 [shape = 'u32[]', space=smem, size = 0x4, offset = 0x4, fixed_abs, tag = 'smem constant byte address 0x4 - core index']
  #allocation1 [shape = 'u32[144,128]{1,0:T(1,128)}', space=vmem, size = 0x12000, scoped, tag = 'internal scratch']
  %s0 = inlined_call_operand.vmem [shape: f32[8,128], index: 0, kind: input, shape index: {}]
  %s1 = inlined_call_operand.vmem [shape: s32[8,1], index: 1, kind: input, shape index: {}]
  %s2 = inlined_call_operand.hbm [shape: f32[8,128], index: 2, kind: output, shape index: {}]
  %s3 = sld [smem:[#allocation0]]
  $region18: #{tpu_custom_call.1} parent=0
    _
  %s5 = ssub.s32 1, %s3
  %s6 = scalar_select 0, %s5, %s3
  $region1: #{tpu_custom_call.1} parent=0
    #allocation2 [shape = 'u8[4096]{0}', space=vmem, size = 0x1000, scoped, tag = 'output window, operand 0, single buffered']
    #allocation3 [shape = 's32[1]{0}', space=sflag, size = 0x4, scoped, tag = 'scoped memory for tpu_custom_call.1']
    %7 = vsyncpa [#allocation3], 0
    // Predicated region
    $region2: #{tpu_custom_call.1} parent=1 // pred_check
      _
    $region3: #{tpu_custom_call.1} parent=1 // pred_check_branch
      %9 = sbr.rel (0) target = $region5
    $region4: #{tpu_custom_call.1} parent=1 // pred_region
      _
    $region5: #{tpu_custom_call.1} parent=1 // pred_fallthru
      _
    // Predicated region
    $region6: #{tpu_custom_call.1} parent=1 // pred_check
      _
    $region7: #{tpu_custom_call.1} parent=1 // pred_check_branch
      %11 = sbr.rel (0) target = $region9
    $region8: #{tpu_custom_call.1} parent=1 // pred_region
      _
    $region9: #{tpu_custom_call.1} parent=1 // pred_fallthru
      _
    %v12 = vld [vmem:[%s0] sm:$0xff]
    %v13 = vld [vmem:[%s1] sm:$0xff]
    %s14 = smul.u32 0, 128
    %v15 = vstv %s14
    %v16 = vsub.s32 %v13, %v15
    %v17 = vlaneseq
    %v18 = vand.u32 %v17, 127
    %19 = vset.pattern.permute.xlu0 0
    %20 = vperm.xlu0 %19, %v16
    %v21 = vpop.permute.xlu0 %20
    %vm22 = vcmp.eq.s32.totalorder %v18, %v21
    %v23 = vsel %vm22, 0.4, 0.0
    %v24 = vsub.f32 %v12, %v23
    %v25 = vmul.f32 %v24, 64.0
    %26 = vst [vmem:[#allocation2] sm:$0xff] %v25
    // Predicated region
    $region10: #{tpu_custom_call.1} parent=1 // pred_check
      _
    $region11: #{tpu_custom_call.1} parent=1 // pred_check_branch
      %28 = sbr.rel (0) target = $region13
    $region12: #{tpu_custom_call.1} parent=1 // pred_region
      %s30 = ssub.s32 128, 128
      %31 = vsyncadd [#allocation3], %s30
      %s33 = sshll.u32 [#allocation2], 4
      %s34 = int_to_ptr.vmem [resolvable:$true] %s33
      %36 = dma.vmem_to_hbm [thread:$0]  %s34, 128, %s2, [#allocation3]
    $region13: #{tpu_custom_call.1} parent=1 // pred_fallthru
      _
    // Predicated region
    $region14: #{tpu_custom_call.1} parent=1 // pred_check
      _
    $region15: #{tpu_custom_call.1} parent=1 // pred_check_branch
      %38 = sbr.rel (0) target = $region17
    $region16: #{tpu_custom_call.1} parent=1 // pred_region
      %39 = dma.done [#allocation3], 128
    $region17: #{tpu_custom_call.1} parent=1 // pred_fallthru
      _
    %40 = vsyncpa [#allocation3], 1

</llo_original>
